<compile_context>
chip_gen: v6e
topology: v6e:2x2x1
jax: 0.10.0
libtpu: 0.0.40
codegen_flags: <defaults>
</compile_context>

<pallas_src>
import functools

import jax
import jax.numpy as jnp
from jax import lax
from jax.experimental import pallas as pl
from jax.experimental.pallas import tpu as pltpu

LANES = 128
SUBLANES = 8
MAX_TILE_ROWS = 4096          # (4096, 128) f32 = 2 MiB per input block
NUM_CORES = 2                 # megacore split on v7x; serial loop elsewhere
PAD_LOGIT = -1.0e4            # finite in f16/bf16/f32; padded elements give exactly 0 loss
VMEM_LIMIT_BYTES = 32 * 1024 * 1024


def _cdiv(a, b):
    return -(-a // b)


def _round_up(a, b):
    return _cdiv(a, b) * b


def _sublane_multiple(dtype):
    # Sub-32-bit dtypes pack along sublanes: f32 -> 8, bf16/f16 -> 16, int8/bool -> 32.
    itemsize = jnp.dtype(dtype).itemsize
    return SUBLANES * max(1, 4 // itemsize)


def _focal_kernel(x_ref, t_ref, o_ref, acc_ref, *, alpha, gamma, rows, tile_rows,
                  num_full_blocks, needs_mask, binary_targets):
    i = pl.program_id(1)

    @pl.when(i == 0)
    def _():
        acc_ref[...] = jnp.zeros_like(acc_ref)

    x = x_ref[...].astype(jnp.float32)
    t = t_ref[...].astype(jnp.float32)

    if binary_targets:
        # Exact for t in {0, 1}: loss = alpha_t * softplus(-z) * sigmoid(-z)^gamma,
        # with z = x for positives and -x for negatives.  Shares e = exp(-|x|).
        pos = t >= 0.5
        z = jnp.where(pos, x, -x)
        e = jnp.exp(-jnp.abs(z))
        one_plus_e = 1.0 + e
        inv = pl.reciprocal(one_plus_e, approx=False)
        one_minus_pt = jnp.where(z <= 0.0, 1.0, e) * inv       # == sigmoid(-z) == 1 - p_t
        ce = jnp.maximum(-z, 0.0) + jnp.log(one_plus_e)        # == softplus(-z) == BCE
    else:
        # General (soft-target-safe) form, numerically stable.
        e = jnp.exp(-jnp.abs(x))
        one_plus_e = 1.0 + e
        inv = pl.reciprocal(one_plus_e, approx=False)
        p = jnp.where(x >= 0.0, 1.0, e) * inv                  # == sigmoid(x)
        ce = jnp.maximum(x, 0.0) - x * t + jnp.log(one_plus_e)
        p_t = p * t + (1.0 - p) * (1.0 - t)
        one_minus_pt = 1.0 - p_t

    g = float(gamma)
    if g == 2.0:
        mod = one_minus_pt * one_minus_pt                      # avoid EUP pow
    elif g.is_integer() and g >= 0.0:
        mod = lax.integer_pow(one_minus_pt, int(g))
    else:
        mod = one_minus_pt ** g

    loss = ce * mod
    if alpha >= 0:
        if binary_targets:
            alpha_t = jnp.where(pos, alpha, 1.0 - alpha)
        else:
            alpha_t = alpha * t + (1.0 - alpha) * (1.0 - t)
        loss = alpha_t * loss

    def _accumulate(v):
        # Full-vreg (8, 128) accumulator: leading-dim reduce is plain vreg adds (VALU),
        # no XLU sublane reduce and no masked single-sublane stores per block.
        acc_ref[...] += v.reshape(-1, SUBLANES, LANES).sum(axis=0)

    if not needs_mask:
        _accumulate(loss)
    else:
        g_idx = pl.program_id(0) * pl.num_programs(1) + i

        @pl.when(g_idx < num_full_blocks)
        def _():
            _accumulate(loss)

        @pl.when(g_idx >= num_full_blocks)
        def _():
            # Only boundary blocks pay for the iota/compare/select.
            row = lax.broadcasted_iota(jnp.int32, loss.shape, 0) + g_idx * tile_rows
            _accumulate(jnp.where(row < rows, loss, 0.0))

    @pl.when(i == pl.num_programs(1) - 1)
    def _():
        o_ref[...] = acc_ref[...].reshape(o_ref.shape)


def focal_loss(inputs, targets, alpha=0.25, gamma=2.0, binary_targets=False):
    """Sigmoid focal loss with mean reduction, matching the PyTorch module.

    Set binary_targets=True only if targets are exactly {0, 1} (bit-identical result,
    fewer VALU ops).  Narrow dtypes (bf16 logits, bf16/int8 targets) are supported and
    reduce HBM traffic; the kernel computes in f32 registers.
    """
    assert inputs.shape == targets.shape, "inputs/targets shape mismatch"
    n_valid = int(inputs.size)
    assert n_valid > 0

    x = inputs.reshape(-1)
    t = targets.reshape(-1)

    sub_mult = max(_sublane_multiple(x.dtype), _sublane_multiple(t.dtype))
    rows = _cdiv(n_valid, LANES)

    if rows <= MAX_TILE_ROWS:
        # Single block covering everything (pad the tiny remainder if unaligned).
        cores, bpc = 1, 1
        tile_rows = rows if rows % sub_mult == 0 else _round_up(rows, sub_mult)
        rows_total = tile_rows
    else:
        # Split rows across cores x blocks; the grid-boundary tail is masked in-kernel
        # (no wrapper-side padding of whole blocks).
        cores = NUM_CORES
        bpc = _cdiv(_cdiv(rows, MAX_TILE_ROWS), cores)
        tile_rows = _round_up(_cdiv(rows, cores * bpc), sub_mult)
        rows_total = rows

    pad = rows_total * LANES - n_valid
    if pad:
        # Only hit when n_valid is not a multiple of 128 (or for tiny unaligned inputs).
        # Padded logits contribute exactly zero loss, so no per-element mask is needed.
        x = jnp.pad(x, (0, pad), constant_values=PAD_LOGIT)
        t = jnp.pad(t, (0, pad), constant_values=0)

    x = x.reshape(rows_total, LANES)
    t = t.reshape(rows_total, LANES)

    num_full_blocks = rows_total // tile_rows
    needs_mask = (cores * bpc * tile_rows) != rows_total

    kernel = functools.partial(
        _focal_kernel,
        alpha=float(alpha), gamma=float(gamma),
        rows=rows_total, tile_rows=tile_rows,
        num_full_blocks=num_full_blocks, needs_mask=needs_mask,
        binary_targets=bool(binary_targets))

    partial_sums = pl.pallas_call(
        kernel,
        out_shape=jax.ShapeDtypeStruct((cores, SUBLANES, LANES), jnp.float32),
        grid_spec=pltpu.PrefetchScalarGridSpec(
            num_scalar_prefetch=0,
            grid=(cores, bpc),
            in_specs=[
                pl.BlockSpec((tile_rows, LANES), lambda c, i: (c * bpc + i, 0)),
                pl.BlockSpec((tile_rows, LANES), lambda c, i: (c * bpc + i, 0)),
            ],
            out_specs=pl.BlockSpec((1, SUBLANES, LANES), lambda c, i: (c, 0, 0)),
            scratch_shapes=[pltpu.VMEM((SUBLANES, LANES), jnp.float32)],
        ),
        compiler_params=pltpu.CompilerParams(
            dimension_semantics=("parallel", "arbitrary"),
            vmem_limit_bytes=VMEM_LIMIT_BYTES,
        ),
    )(x, t)

    # Final cross-lane / cross-sublane / cross-core reduce and mean — once, outside.
    return jnp.sum(partial_sums) / jnp.float32(n_valid)


class FocalLoss:
    """Thin module-like wrapper mirroring the PyTorch class."""

    def __init__(self, alpha=0.25, gamma=2, binary_targets=False):
        self.alpha = alpha
        self.gamma = gamma
        self.binary_targets = binary_targets

    def __call__(self, inputs, targets):
        return focal_loss(inputs, targets, self.alpha, self.gamma, self.binary_targets)


if __name__ == "__main__":
    key = jax.random.PRNGKey(0)
    k1, k2 = jax.random.split(key)

    # NCHW logits and {0,1} targets, as the module's forward implies.
    x = jax.random.normal(k1, (2, 4, 16, 16), dtype=jnp.float32)
    # Targets produced directly as bf16 ({0,1} is exact) — narrow-dtype passthrough.
    t_bf16 = (jax.random.uniform(k2, (2, 4, 16, 16)) > 0.5).astype(jnp.bfloat16)
    t_f32 = t_bf16.astype(jnp.float32)

    # Optimized binary-target path (bf16 targets straight through).
    loss_bin = focal_loss(x, t_bf16, alpha=0.25, gamma=2.0, binary_targets=True)
    # General soft-target-safe path (f32 targets).
    loss_gen = FocalLoss(alpha=0.25, gamma=2)(x, t_f32)
    jax.block_until_ready((loss_bin, loss_gen))

    # Pure-JAX reference (f32 everywhere), matching the PyTorch module.
    p = jax.nn.sigmoid(x)
    ce = jnp.maximum(x, 0.0) - x * t_f32 + jnp.log1p(jnp.exp(-jnp.abs(x)))
    p_t = p * t_f32 + (1 - p) * (1 - t_f32)
    ref = ce * (1 - p_t) ** 2.0
    alpha_t = 0.25 * t_f32 + 0.75 * (1 - t_f32)
    ref = jnp.mean(alpha_t * ref)

    assert jnp.allclose(loss_bin, ref, rtol=1e-5, atol=1e-6), (loss_bin, ref)
    assert jnp.allclose(loss_gen, ref, rtol=1e-5, atol=1e-6), (loss_gen, ref)
    print("KERNEL_OK")
</pallas_src>

<mosaic_0001>
module attributes {stable_mosaic.version = 11 : i64} {
  func.func @_focal_kernel(%arg0: i32, %arg1: i32, %arg2: memref<16x128xf32, #tpu.memory_space<vmem>>, %arg3: memref<16x128xbf16, #tpu.memory_space<vmem>>, %arg4: memref<1x8x128xf32, #tpu.memory_space<vmem>>, %arg5: memref<8x128xf32, #tpu.memory_space<vmem>>) attributes {dimension_semantics = [#tpu.dimension_semantics<parallel>, #tpu.dimension_semantics<arbitrary>], iteration_bounds = array<i64: 1, 1>, scalar_prefetch = 0 : i64, scratch_operands = 1 : i64, tpu.core_type = #tpu.core_type<tc>, window_params = [{transform_indices = @transform_0, window_bounds = array<i64: 16, 128>}, {transform_indices = @transform_1, window_bounds = array<i64: 16, 128>}, {transform_indices = @transform_2, window_bounds = array<i64: 1, 8, 128>}]} {
    %c0_i32 = arith.constant 0 : i32
    %0 = arith.cmpi eq, %arg1, %c0_i32 : i32
    %1 = arith.extui %0 : i1 to i32
    %c0_i32_0 = arith.constant 0 : i32
    %2 = arith.cmpi ne, %1, %c0_i32_0 : i32
    scf.if %2 {
      %cst_20 = arith.constant 0.000000e+00 : f32
      %43 = vector.broadcast %cst_20 : f32 to vector<8x128xf32>
      %c0_21 = arith.constant 0 : index
      %c0_22 = arith.constant 0 : index
      %44 = vector.load %arg5[%c0_21, %c0_22] : memref<8x128xf32, #tpu.memory_space<vmem>>, vector<8x128xf32>
      tpu.vector_store %arg5[%c0_21, %c0_22], %43 {strides = array<i32>} : memref<8x128xf32, #tpu.memory_space<vmem>>, vector<8x128xf32>,
    } else {
    }
    %c0 = arith.constant 0 : index
    %c0_1 = arith.constant 0 : index
    %3 = vector.load %arg2[%c0, %c0_1] : memref<16x128xf32, #tpu.memory_space<vmem>>, vector<16x128xf32>
    %c0_2 = arith.constant 0 : index
    %c0_3 = arith.constant 0 : index
    %4 = vector.load %arg3[%c0_2, %c0_3] : memref<16x128xbf16, #tpu.memory_space<vmem>>, vector<16x128xbf16>
    %5 = arith.extf %4 : vector<16x128xbf16> to vector<16x128xf32>
    %cst = arith.constant 5.000000e-01 : f32
    %6 = vector.broadcast %cst : f32 to vector<16x128xf32>
    %7 = arith.cmpf oge, %5, %6 : vector<16x128xf32>
    %cst_4 = arith.constant 0.000000e+00 : f32
    %8 = vector.broadcast %cst_4 : f32 to vector<16x128xf32>
    %9 = arith.subf %8, %3 : vector<16x128xf32>
    %10 = arith.select %7, %3, %9 : vector<16x128xi1>, vector<16x128xf32>
    %11 = math.absf %10 : vector<16x128xf32>
    %cst_5 = arith.constant 0.000000e+00 : f32
    %12 = vector.broadcast %cst_5 : f32 to vector<16x128xf32>
    %13 = arith.subf %12, %11 : vector<16x128xf32>
    %14 = math.exp %13 : vector<16x128xf32>
    %cst_6 = arith.constant 1.000000e+00 : f32
    %15 = vector.broadcast %cst_6 : f32 to vector<16x128xf32>
    %16 = arith.addf %15, %14 : vector<16x128xf32>
    %17 = tpu.reciprocal %16 : vector<16x128xf32> -> vector<16x128xf32>
    %cst_7 = arith.constant 0.000000e+00 : f32
    %18 = vector.broadcast %cst_7 : f32 to vector<16x128xf32>
    %19 = arith.cmpf ole, %10, %18 : vector<16x128xf32>
    %cst_8 = arith.constant 1.000000e+00 : f32
    %20 = vector.broadcast %cst_8 : f32 to vector<16x128xf32>
    %21 = arith.select %19, %20, %14 : vector<16x128xi1>, vector<16x128xf32>
    %22 = arith.mulf %21, %17 : vector<16x128xf32>
    %cst_9 = arith.constant 0.000000e+00 : f32
    %23 = vector.broadcast %cst_9 : f32 to vector<16x128xf32>
    %24 = arith.subf %23, %10 : vector<16x128xf32>
    %cst_10 = arith.constant 0.000000e+00 : f32
    %25 = vector.broadcast %cst_10 : f32 to vector<16x128xf32>
    %26 = arith.maximumf %24, %25 : vector<16x128xf32>
    %27 = math.log %16 : vector<16x128xf32>
    %28 = arith.addf %26, %27 : vector<16x128xf32>
    %29 = arith.mulf %22, %22 : vector<16x128xf32>
    %30 = arith.mulf %28, %29 : vector<16x128xf32>
    %cst_11 = arith.constant 2.500000e-01 : f32
    %cst_12 = arith.constant 7.500000e-01 : f32
    %31 = vector.broadcast %cst_11 : f32 to vector<16x128xf32>
    %32 = vector.broadcast %cst_12 : f32 to vector<16x128xf32>
    %33 = arith.select %7, %31, %32 : vector<16x128xi1>, vector<16x128xf32>
    %34 = arith.mulf %33, %30 : vector<16x128xf32>
    %c0_13 = arith.constant 0 : index
    %c0_14 = arith.constant 0 : index
    %35 = vector.load %arg5[%c0_13, %c0_14] : memref<8x128xf32, #tpu.memory_space<vmem>>, vector<8x128xf32>
    %36 = vector.shape_cast %34 : vector<16x128xf32> to vector<2x8x128xf32>
    %cst_15 = arith.constant dense<0.000000e+00> : vector<8x128xf32>
    %37 = vector.multi_reduction <add>, %36, %cst_15 [0] : vector<2x8x128xf32> to vector<8x128xf32>
    %38 = arith.addf %35, %37 : vector<8x128xf32>
    %c0_16 = arith.constant 0 : index
    %c0_17 = arith.constant 0 : index
    %39 = vector.load %arg5[%c0_16, %c0_17] : memref<8x128xf32, #tpu.memory_space<vmem>>, vector<8x128xf32>
    tpu.vector_store %arg5[%c0_16, %c0_17], %38 {strides = array<i32>} : memref<8x128xf32, #tpu.memory_space<vmem>>, vector<8x128xf32>,
    %c0_i32_18 = arith.constant 0 : i32
    %40 = arith.cmpi eq, %arg1, %c0_i32_18 : i32
    %41 = arith.extui %40 : i1 to i32
    %c0_i32_19 = arith.constant 0 : i32
    %42 = arith.cmpi ne, %41, %c0_i32_19 : i32
    scf.if %42 {
      %c0_20 = arith.constant 0 : index
      %c0_21 = arith.constant 0 : index
      %43 = vector.load %arg5[%c0_20, %c0_21] : memref<8x128xf32, #tpu.memory_space<vmem>>, vector<8x128xf32>
      %44 = vector.shape_cast %43 : vector<8x128xf32> to vector<1x8x128xf32>
      %c0_22 = arith.constant 0 : index
      %c0_23 = arith.constant 0 : index
      %c0_24 = arith.constant 0 : index
      %45 = vector.load %arg4[%c0_22, %c0_23, %c0_24] : memref<1x8x128xf32, #tpu.memory_space<vmem>>, vector<1x8x128xf32>
      tpu.vector_store %arg4[%c0_22, %c0_23, %c0_24], %44 {strides = array<i32>} : memref<1x8x128xf32, #tpu.memory_space<vmem>>, vector<1x8x128xf32>,
    } else {
    }
    return
  }
  func.func @transform_0(%arg0: i32, %arg1: i32) -> (i32, i32) {
    %c1_i32 = arith.constant 1 : i32
    %0 = arith.muli %arg0, %c1_i32 : i32
    %1 = arith.addi %0, %arg1 : i32
    %c0_i32 = arith.constant 0 : i32
    %c0_i32_0 = arith.constant 0 : i32
    return %1, %c0_i32 : i32, i32
  }
  func.func @transform_1(%arg0: i32, %arg1: i32) -> (i32, i32) {
    %c1_i32 = arith.constant 1 : i32
    %0 = arith.muli %arg0, %c1_i32 : i32
    %1 = arith.addi %0, %arg1 : i32
    %c0_i32 = arith.constant 0 : i32
    %c0_i32_0 = arith.constant 0 : i32
    return %1, %c0_i32 : i32, i32
  }
  func.func @transform_2(%arg0: i32, %arg1: i32) -> (i32, i32, i32) {
    %c0_i32 = arith.constant 0 : i32
    %c0_i32_0 = arith.constant 0 : i32
    %c0_i32_1 = arith.constant 0 : i32
    return %arg0, %c0_i32, %c0_i32_0 : i32, i32, i32
  }
}

</mosaic_0001>

<llo_original>
// kernel: tpu_custom_call.1
$region0: #{tpu_custom_call.1}
  #allocation0 [shape = 'u32[]', space=smem, size = 0x4, offset = 0x4, fixed_abs, tag = 'smem constant byte address 0x4 - core index']
  #allocation1 [shape = 'u32[144,128]{1,0:T(1,128)}', space=vmem, size = 0x12000, scoped, tag = 'internal scratch']
  #allocation2 [shape = 'f32[8,128]{1,0:T(8,128)}', space=vmem, size = 0x1000, scoped, tag = 'scratch operand']
  %s0 = inlined_call_operand.hbm [shape: f32[16,128], index: 0, kind: input, shape index: {}]
  %s1 = inlined_call_operand.hbm [shape: bf16[16,128], index: 1, kind: input, shape index: {}]
  %s2 = inlined_call_operand.hbm [shape: f32[1,8,128], index: 2, kind: output, shape index: {}]
  %s3 = sld [smem:[#allocation0]]
  $region34: #{tpu_custom_call.1} parent=0
    _
  %s5 = ssub.s32 1, %s3
  %s6 = scalar_select 0, %s5, %s3
  $region1: #{tpu_custom_call.1} parent=0
    #allocation3 [shape = 'u8[8192]{0}', space=vmem, size = 0x2000, scoped, tag = 'input window, operand 0, single buffered']
    #allocation4 [shape = 's32[1]{0}', space=sflag, size = 0x4, scoped, tag = 'scoped memory for tpu_custom_call.1']
    #allocation5 [shape = 's32[1]{0}', space=sflag, size = 0x4, scoped, tag = 'scoped memory for tpu_custom_call.1']
    #allocation6 [shape = 'u8[4096]{0}', space=vmem, size = 0x1000, scoped, tag = 'input window, operand 1, single buffered']
    #allocation7 [shape = 's32[1]{0}', space=sflag, size = 0x4, scoped, tag = 'scoped memory for tpu_custom_call.1']
    #allocation8 [shape = 'u8[4096]{0}', space=vmem, size = 0x1000, scoped, tag = 'output window, operand 0, single buffered']
    %7 = vsyncpa [#allocation4], 0
    %8 = vsyncpa [#allocation7], 0
    %9 = vsyncpa [#allocation5], 0
    // Predicated region
    $region2: #{tpu_custom_call.1} parent=1 // pred_check
      _
    $region3: #{tpu_custom_call.1} parent=1 // pred_check_branch
      %11 = sbr.rel (0) target = $region5
    $region4: #{tpu_custom_call.1} parent=1 // pred_region
      %s12 = sadd.s32 0, 0
      %s13 = smul.u32 2, %s12
      %s15 = ssub.s32 256, 256
      %16 = vsyncadd [#allocation4], %s15
      %s17 = smul.addr %s13, 128
      %s18 = scalar_lea.hbm %s0, %s17
      %s19 = sshll.u32 [#allocation3], 4
      %s20 = int_to_ptr.vmem [resolvable:$true] %s19
      %25 = dma.hbm_to_vmem [thread:$0]  %s18, 256, %s20, [#allocation4], 128, 128, 8
    $region5: #{tpu_custom_call.1} parent=1 // pred_fallthru
      _
    // Predicated region
    $region6: #{tpu_custom_call.1} parent=1 // pred_check
      _
    $region7: #{tpu_custom_call.1} parent=1 // pred_check_branch
      %27 = sbr.rel (0) target = $region9
    $region8: #{tpu_custom_call.1} parent=1 // pred_region
      %s28 = sadd.s32 0, 0
      %s29 = smul.u32 2, %s28
      %s31 = ssub.s32 128, 128
      %32 = vsyncadd [#allocation7], %s31
      %s33 = smul.addr %s29, 64
      %s34 = scalar_lea.hbm %s1, %s33
      %s35 = sshll.u32 [#allocation6], 4
      %s36 = int_to_ptr.vmem [resolvable:$true] %s35
      %41 = dma.hbm_to_vmem [thread:$0]  %s34, 128, %s36, [#allocation7], 64, 64, 4
    $region9: #{tpu_custom_call.1} parent=1 // pred_fallthru
      _
    // Predicated region
    $region10: #{tpu_custom_call.1} parent=1 // pred_check
      _
    $region11: #{tpu_custom_call.1} parent=1 // pred_check_branch
      %43 = sbr.rel (0) target = $region13
    $region12: #{tpu_custom_call.1} parent=1 // pred_region
      %44 = dma.done [#allocation4], 256
    $region13: #{tpu_custom_call.1} parent=1 // pred_fallthru
      _
    // Predicated region
    $region14: #{tpu_custom_call.1} parent=1 // pred_check
      _
    $region15: #{tpu_custom_call.1} parent=1 // pred_check_branch
      %46 = sbr.rel (0) target = $region17
    $region16: #{tpu_custom_call.1} parent=1 // pred_region
      %47 = dma.done [#allocation7], 128
    $region17: #{tpu_custom_call.1} parent=1 // pred_fallthru
      _
    %s48 = sadd.s32 0, 0
    %s49 = smul.u32 2, %s48
    %s50 = sadd.s32 0, 0
    %s51 = smul.u32 2, %s50
    %p52 = scmp.eq.s32.totalorder 0, 0
    // Predicated region
    $region18: #{tpu_custom_call.1} parent=1 // pred_check
      %p53 = pneg %p52
    $region19: #{tpu_custom_call.1} parent=1 // pred_check_branch
      %55 = sbr.rel (%p53) target = $region21
    $region20: #{tpu_custom_call.1} parent=1 // pred_region
      %56 = vst [vmem:[#allocation2] sm:$0xff] 0.0
    $region21: #{tpu_custom_call.1} parent=1 // pred_fallthru
      _
    %v57 = vld [vmem:[#allocation3] sm:$0xff]
    %v58 = vld [vmem:[#allocation3 + $0x8] sm:$0xff]
    %v59 = vld [vmem:[#allocation6] sm:$0xf]
    %v60 = vld [vmem:[#allocation6 + $0x4] sm:$0xf]
    %v61 = vunpack.c.l.bf16 %v59
    %v62 = vunpack.c.l.bf16 %v60
    %vm63 = vcmp.ge.f32.partialorder %v61, 0.5
    %vm64 = vcmp.ge.f32.partialorder %v62, 0.5
    %v65 = vsub.f32 0.0, %v57
    %v66 = vsub.f32 0.0, %v58
    %v67 = vsel %vm63, %v57, %v65
    %v68 = vsel %vm64, %v58, %v66
    %v69 = vand.u32 2147483647, %v67
    %v70 = vand.u32 2147483647, %v68
    %v71 = vsub.f32 0.0, %v69
    %v72 = vsub.f32 0.0, %v70
    %v73 = vmul.f32 %v71, 1.442695
    %v74 = vpow.pop %v73
    %v75 = vmul.f32 %v72, 1.442695
    %v76 = vpow.pop %v75
    %v77 = vadd.f32 %v74, 1.0
    %v78 = vadd.f32 %v76, 1.0
    %v79 = vrcp.pop %v77
    %v80 = vrcp.pop %v78
    %vm81 = vcmp.le.f32.partialorder %v67, 0.0
    %vm82 = vcmp.le.f32.partialorder %v68, 0.0
    %v83 = vsel %vm81, 1.0, %v74
    %v84 = vsel %vm82, 1.0, %v76
    %v85 = vmul.f32 %v83, %v79
    %v86 = vmul.f32 %v84, %v80
    %v87 = vsub.f32 0.0, %v67
    %v88 = vsub.f32 0.0, %v68
    %v89 = vmax.f32 %v87, 0.0
    %v90 = vmax.f32 %v88, 0.0
    %v91 = vlog2.pop %v77
    %v92 = vmul.f32 %v91, 0.6931472
    %v93 = vlog2.pop %v78
    %v94 = vmul.f32 %v93, 0.6931472
    %v95 = vadd.f32 %v89, %v92
    %v96 = vadd.f32 %v90, %v94
    %v97 = vmul.f32 %v85, %v85
    %v98 = vmul.f32 %v86, %v86
    %v99 = vmul.f32 %v95, %v97
    %v100 = vmul.f32 %v96, %v98
    %v101 = vsel %vm63, 0.25, 0.75
    %v102 = vsel %vm64, 0.25, 0.75
    %v103 = vmul.f32 %v101, %v99
    %v104 = vmul.f32 %v102, %v100
    %v105 = vld [vmem:[#allocation2] sm:$0xff]
    %v106 = vadd.f32 %v103, %v104
    %v107 = vadd.f32 %v105, %v106
    %108 = vst [vmem:[#allocation2] sm:$0xff] %v107
    // Predicated region
    $region22: #{tpu_custom_call.1} parent=1 // pred_check
      %p109 = pneg %p52
    $region23: #{tpu_custom_call.1} parent=1 // pred_check_branch
      %111 = sbr.rel (%p109) target = $region25
    $region24: #{tpu_custom_call.1} parent=1 // pred_region
      %v112 = vld [vmem:[#allocation2] sm:$0xff]
      %113 = vst [vmem:[#allocation8] sm:$0xff] %v112
    $region25: #{tpu_custom_call.1} parent=1 // pred_fallthru
      _
    // Predicated region
    $region26: #{tpu_custom_call.1} parent=1 // pred_check
      _
    $region27: #{tpu_custom_call.1} parent=1 // pred_check_branch
      %115 = sbr.rel (0) target = $region29
    $region28: #{tpu_custom_call.1} parent=1 // pred_region
      %s117 = ssub.s32 128, 128
      %118 = vsyncadd [#allocation5], %s117
      %s120 = sshll.u32 [#allocation8], 4
      %s121 = int_to_ptr.vmem [resolvable:$true] %s120
      %123 = dma.vmem_to_hbm [thread:$0]  %s121, 128, %s2, [#allocation5]
    $region29: #{tpu_custom_call.1} parent=1 // pred_fallthru
      _
    // Predicated region
    $region30: #{tpu_custom_call.1} parent=1 // pred_check
      _
    $region31: #{tpu_custom_call.1} parent=1 // pred_check_branch
      %125 = sbr.rel (0) target = $region33
    $region32: #{tpu_custom_call.1} parent=1 // pred_region
      %126 = dma.done [#allocation5], 128
    $region33: #{tpu_custom_call.1} parent=1 // pred_fallthru
      _
    %127 = vsyncpa [#allocation4], 1
    %128 = vsyncpa [#allocation7], 1
    %129 = vsyncpa [#allocation5], 1

</llo_original>
